<compile_context>
chip_gen: v7x
topology: tpu7x:2x2x1
jax: 0.10.0
libtpu: 0.0.40
codegen_flags: <defaults>
</compile_context>

<pallas_src>
import functools

import jax
import jax.numpy as jnp
from jax.experimental import pallas as pl
from jax.experimental.pallas import tpu as pltpu


# ----------------------------- Pallas kernel --------------------------------
def _amp_gemm_kernel(p_ref, w_ref, b_ref, o_ref):
    # AMP semantics: bf16 operands, fp32 accumulation on the MXU,
    # bias-add + ReLU in fp32, autocast (bf16) output.
    acc = jnp.dot(p_ref[...], w_ref[...], preferred_element_type=jnp.float32)
    acc = acc + b_ref[...]                       # [1, Nl] fp32 bias broadcast
    o_ref[...] = jnp.maximum(acc, 0.0).astype(jnp.bfloat16)


def _amp_gemm(patches, w_mat, bias_row, *, tile_rows):
    """Tiled [Mr, Kb] x [Kb, Nl] GEMM + bias + ReLU (bf16 in, bf16 out)."""
    Mr, Kb = patches.shape
    _, Nl = w_mat.shape
    assert Mr % tile_rows == 0
    grid_m = Mr // tile_rows

    flops = 2 * Mr * Kb * Nl
    bytes_accessed = (patches.size * patches.dtype.itemsize
                      + w_mat.size * w_mat.dtype.itemsize
                      + bias_row.size * bias_row.dtype.itemsize
                      + Mr * Nl * 2)  # bf16 output

    return pl.pallas_call(
        _amp_gemm_kernel,
        out_shape=jax.ShapeDtypeStruct((Mr, Nl), jnp.bfloat16),
        grid_spec=pltpu.PrefetchScalarGridSpec(
            num_scalar_prefetch=0,
            grid=(grid_m,),
            in_specs=[
                # streamed, double-buffered bf16 patch tiles
                pl.BlockSpec((tile_rows, Kb), lambda i: (i, 0)),
                # weight & bias stay VMEM-resident across the whole grid
                pl.BlockSpec((Kb, Nl), lambda i: (0, 0)),
                pl.BlockSpec((1, Nl), lambda i: (0, 0)),
            ],
            out_specs=pl.BlockSpec((tile_rows, Nl), lambda i: (i, 0)),
        ),
        compiler_params=pltpu.CompilerParams(
            # M tiles are independent -> shard across the 2 TCs on v7x.
            dimension_semantics=("parallel",)),
        cost_estimate=pl.CostEstimate(
            flops=flops, transcendentals=0, bytes_accessed=bytes_accessed),
    )(patches, w_mat, bias_row)


# ------------------------------ JAX glue -------------------------------------
def _im2col_nchw(x, k, pad):
    # x: [N, C, H, W] -> patches [N*H*W, C*k*k] in PyTorch unfold order (c, kh, kw)
    N, C, H, W = x.shape
    xp = jnp.pad(x, ((0, 0), (0, 0), (pad, pad), (pad, pad)))
    cols = [xp[:, :, dy:dy + H, dx:dx + W] for dy in range(k) for dx in range(k)]
    patches = jnp.stack(cols, axis=2)              # [N, C, k*k, H, W]
    patches = patches.transpose(0, 3, 4, 1, 2)     # [N, H, W, C, k*k]
    return patches.reshape(N * H * W, C * k * k)


@functools.partial(jax.jit, static_argnames=("k", "pad", "tile_rows"))
def trace_amp_wrape_forward(x, weight, bias, *, k=3, pad=1, tile_rows=256):
    """Equivalent of TraceAmpWrape(Conv2dReLU)(x) with x in NCHW fp32."""
    N, C, H, W = x.shape
    C_out = weight.shape[0]
    K = C * k * k
    M = N * H * W

    # autocast: cast BEFORE building patches -> all streamed HBM bytes are bf16.
    # TODO(synk): fusing im2col into the kernel would also remove the k*k
    #             patch-materialization blowup; kept wrapper-side for clarity.
    xb = x.astype(jnp.bfloat16)
    wb = weight.astype(jnp.bfloat16)
    patches = _im2col_nchw(xb, k, pad)             # [M, K] bf16, no K padding

    # Lane-dense packing: `pack` output pixels per GEMM row, so the output
    # block is [Mr, pack*C_out] of all-real bf16 lanes (no padded writeback).
    if C_out <= 128 and 128 % C_out == 0:
        pack = 128 // C_out
    else:
        pack = 1
    n_real = pack * C_out
    Nl = ((n_real + 127) // 128) * 128

    # Tile sizing: multiple of 8 sublanes, clamped to the (rounded) work size.
    tile_rows = max(8, (int(tile_rows) // 8) * 8)
    rows_needed = ((-(-M // pack)) + 7) // 8 * 8
    tile_rows = min(tile_rows, rows_needed)
    Mr = -(-rows_needed // tile_rows) * tile_rows  # rows, multiple of tile_rows
    Mp = Mr * pack                                 # padded pixel count

    patches = jnp.pad(patches, ((0, Mp - M), (0, 0)))
    packed_patches = patches.reshape(Mr, pack * K)          # free reshape

    # Block-diagonal weight [pack*K, pack*C_out] keeps output lanes dense.
    w_mat = wb.reshape(C_out, K).T                           # [K, C_out]
    w_bd = jnp.kron(jnp.eye(pack, dtype=jnp.bfloat16), w_mat)
    w_bd = jnp.pad(w_bd, ((0, 0), (0, Nl - n_real)))         # [pack*K, Nl]
    bias_row = jnp.tile(bias.astype(jnp.float32), pack).reshape(1, n_real)
    bias_row = jnp.pad(bias_row, ((0, 0), (0, Nl - n_real)))  # [1, Nl] fp32

    out_packed = _amp_gemm(packed_patches, w_bd, bias_row,
                           tile_rows=tile_rows)               # [Mr, Nl] bf16

    out = out_packed[:, :n_real].reshape(Mr * pack, C_out)[:M]   # [M, C_out]
    out = out.reshape(N, H, W, C_out)                            # NHWC
    return out.transpose(0, 3, 1, 2)                             # NCHW, bf16


# ------------------------------ main ------------------------------------------
if __name__ == "__main__":
    key = jax.random.PRNGKey(0)
    kx, kw, kb = jax.random.split(key, 3)

    N, C_in, H, W = 2, 4, 16, 16
    C_out, k = 8, 3

    x = jax.random.normal(kx, (N, C_in, H, W), dtype=jnp.float32)
    weight = jax.random.normal(kw, (C_out, C_in, k, k), dtype=jnp.float32) * 0.1
    bias = jax.random.normal(kb, (C_out,), dtype=jnp.float32) * 0.1

    # tile_rows=8 at this small shape -> grid=(4,), exercising the pipelined path.
    out = trace_amp_wrape_forward(x, weight, bias, k=k, pad=1, tile_rows=8)
    out = jax.block_until_ready(out)
    assert out.shape == (N, C_out, H, W) and out.dtype == jnp.bfloat16

    # Reference: same conv in bf16 compute / fp32 accum via lax.conv, + bias + ReLU.
    ref = jax.lax.conv_general_dilated(
        x.astype(jnp.bfloat16), weight.astype(jnp.bfloat16),
        window_strides=(1, 1), padding=((1, 1), (1, 1)),
        dimension_numbers=("NCHW", "OIHW", "NCHW"),
        preferred_element_type=jnp.float32)
    ref = jnp.maximum(ref + bias.reshape(1, C_out, 1, 1), 0.0).astype(jnp.bfloat16)
    assert jnp.allclose(out.astype(jnp.float32), ref.astype(jnp.float32),
                        atol=2e-2, rtol=2e-2)

    print("KERNEL_OK")
</pallas_src>

<mosaic_0001>
module attributes {stable_mosaic.version = 11 : i64} {
  func.func @_amp_gemm_kernel(%arg0: i32, %arg1: memref<8x576xbf16, #tpu.memory_space<vmem>>, %arg2: memref<576x128xbf16, #tpu.memory_space<vmem>>, %arg3: memref<1x128xf32, #tpu.memory_space<vmem>>, %arg4: memref<8x128xbf16, #tpu.memory_space<vmem>>) attributes {dimension_semantics = [#tpu.dimension_semantics<parallel>], iteration_bounds = array<i64: 4>, scalar_prefetch = 0 : i64, scratch_operands = 0 : i64, tpu.core_type = #tpu.core_type<tc>, window_params = [{transform_indices = @transform_0, window_bounds = array<i64: 8, 576>}, {pipeline_mode = #tpu.pipeline_mode<synchronous>, transform_indices = @transform_1, window_bounds = array<i64: 576, 128>}, {pipeline_mode = #tpu.pipeline_mode<synchronous>, transform_indices = @transform_2, window_bounds = array<i64: 1, 128>}, {transform_indices = @transform_3, window_bounds = array<i64: 8, 128>}]} {
    %c0 = arith.constant 0 : index
    %c0_0 = arith.constant 0 : index
    %0 = vector.load %arg1[%c0, %c0_0] : memref<8x576xbf16, #tpu.memory_space<vmem>>, vector<8x576xbf16>
    %c0_1 = arith.constant 0 : index
    %c0_2 = arith.constant 0 : index
    %1 = vector.load %arg2[%c0_1, %c0_2] : memref<576x128xbf16, #tpu.memory_space<vmem>>, vector<576x128xbf16>
    %cst = arith.constant dense<0.000000e+00> : vector<8x128xf32>
    %2 = tpu.matmul %0, %1, %cst {dimension_numbers = #tpu.dot_dimension_numbers<[1], [0], [0], [1], [0, 0, 1, 1], [], []>} : vector<8x576xbf16>, vector<576x128xbf16>, vector<8x128xf32> -> vector<8x128xf32>
    %c0_3 = arith.constant 0 : index
    %c0_4 = arith.constant 0 : index
    %3 = vector.load %arg3[%c0_3, %c0_4] : memref<1x128xf32, #tpu.memory_space<vmem>>, vector<1x128xf32>
    %4 = vector.broadcast %3 : vector<1x128xf32> to vector<8x128xf32>
    %5 = arith.addf %2, %4 : vector<8x128xf32>
    %cst_5 = arith.constant 0.000000e+00 : f32
    %6 = vector.broadcast %cst_5 : f32 to vector<8x128xf32>
    %7 = arith.maximumf %5, %6 : vector<8x128xf32>
    %8 = arith.truncf %7 : vector<8x128xf32> to vector<8x128xbf16>
    %c0_6 = arith.constant 0 : index
    %c0_7 = arith.constant 0 : index
    %9 = vector.load %arg4[%c0_6, %c0_7] : memref<8x128xbf16, #tpu.memory_space<vmem>>, vector<8x128xbf16>
    tpu.vector_store %arg4[%c0_6, %c0_7], %8 {strides = array<i32>} : memref<8x128xbf16, #tpu.memory_space<vmem>>, vector<8x128xbf16>,
    return
  }
  func.func @transform_0(%arg0: i32) -> (i32, i32) {
    %c0_i32 = arith.constant 0 : i32
    %c0_i32_0 = arith.constant 0 : i32
    return %arg0, %c0_i32 : i32, i32
  }
  func.func @transform_1(%arg0: i32) -> (i32, i32) {
    %c0_i32 = arith.constant 0 : i32
    %c0_i32_0 = arith.constant 0 : i32
    %c0_i32_1 = arith.constant 0 : i32
    return %c0_i32, %c0_i32_0 : i32, i32
  }
  func.func @transform_2(%arg0: i32) -> (i32, i32) {
    %c0_i32 = arith.constant 0 : i32
    %c0_i32_0 = arith.constant 0 : i32
    %c0_i32_1 = arith.constant 0 : i32
    return %c0_i32, %c0_i32_0 : i32, i32
  }
  func.func @transform_3(%arg0: i32) -> (i32, i32) {
    %c0_i32 = arith.constant 0 : i32
    %c0_i32_0 = arith.constant 0 : i32
    return %arg0, %c0_i32 : i32, i32
  }
}

</mosaic_0001>

<llo_original>
// kernel: tile.8
$region0: #{tile.8}
  #allocation0 [shape = 's32[1]{0}', space=sflag, size = 0x4, scoped, tag = 'scoped memory for tile.8']
  %s0 = inlined_call_operand.vmem [shape: f32[8], index: 0, kind: input, shape index: {}]
  %s1 = inlined_call_operand.vmem [shape: f32[16,8], index: 1, kind: output, shape index: {}]
  // Predicated region
  $region2: #{tile.8} parent=0 // pred_check
    _
  $region3: #{tile.8} parent=0 // pred_check_branch
    %3 = sbr.rel (0) target = $region5
  $region4: #{tile.8} parent=0 // pred_region
    _
  $region5: #{tile.8} parent=0 // pred_fallthru
    _
  %v4 = vld [vmem:[%s0] ss:$0 sm:$0xff]
  %5 = vst [vmem:[%s1] sm:$0xff] %v4
  %s6 = scalar_lea.vmem %s1, 8
  %7 = vst [vmem:[%s6] sm:$0xff] %v4

// kernel: tile.9
$region0: #{tile.9}
  %s0 = inlined_call_operand.vmem [shape: f32[16,8], index: 0, kind: input, shape index: {}]
  %s1 = inlined_call_operand.vmem [shape: f32[1,128], index: 1, kind: output, shape index: {}]
  $region1: #{tile.9} parent=0
    #allocation0 [shape = 'u8[4096]{0}', space=vmem, size = 0x1000, scoped, tag = 'scoped mem for output reshape']
    %v2 = vld [vmem:[%s0] sm:$0x1]
    %vm3 = vcmask 64512
    %4 = vst.msk [vmem:[#allocation0] sm:$0x1] %vm3, %v2
    %s5 = scalar_lea.vmem %s0, 15
    %v6 = vld [vmem:[%s5] sm:$0x1]
    %7 = vrot.lane.b32.xlu0 %v6, 120
    %v8 = vpop.permute.xlu0 %7
    %vm9 = vcmask 1048512
    %10 = vst.msk [vmem:[#allocation0] sm:$0x1] %vm9, %v8
    %s11 = scalar_lea.vmem %s0, 14
    %v12 = vld [vmem:[%s11] sm:$0x1]
    %13 = vrot.lane.b32.xlu0 %v12, 112
    %v14 = vpop.permute.xlu0 %13
    %vm15 = vcmask 982912
    %16 = vst.msk [vmem:[#allocation0] sm:$0x1] %vm15, %v14
    %s17 = scalar_lea.vmem %s0, 13
    %v18 = vld [vmem:[%s17] sm:$0x1]
    %19 = vrot.lane.b32.xlu0 %v18, 104
    %v20 = vpop.permute.xlu0 %19
    %vm21 = vcmask 917312
    %22 = vst.msk [vmem:[#allocation0] sm:$0x1] %vm21, %v20
    %s23 = scalar_lea.vmem %s0, 12
    %v24 = vld [vmem:[%s23] sm:$0x1]
    %25 = vrot.lane.b32.xlu0 %v24, 96
    %v26 = vpop.permute.xlu0 %25
    %vm27 = vcmask 851712
    %28 = vst.msk [vmem:[#allocation0] sm:$0x1] %vm27, %v26
    %s29 = scalar_lea.vmem %s0, 11
    %v30 = vld [vmem:[%s29] sm:$0x1]
    %31 = vrot.lane.b32.xlu0 %v30, 88
    %v32 = vpop.permute.xlu0 %31
    %vm33 = vcmask 786112
    %34 = vst.msk [vmem:[#allocation0] sm:$0x1] %vm33, %v32
    %s35 = scalar_lea.vmem %s0, 10
    %v36 = vld [vmem:[%s35] sm:$0x1]
    %37 = vrot.lane.b32.xlu0 %v36, 80
    %v38 = vpop.permute.xlu0 %37
    %vm39 = vcmask 720512
    %40 = vst.msk [vmem:[#allocation0] sm:$0x1] %vm39, %v38
    %s41 = scalar_lea.vmem %s0, 9
    %v42 = vld [vmem:[%s41] sm:$0x1]
    %43 = vrot.lane.b32.xlu0 %v42, 72
    %v44 = vpop.permute.xlu0 %43
    %vm45 = vcmask 654912
    %46 = vst.msk [vmem:[#allocation0] sm:$0x1] %vm45, %v44
    %s47 = scalar_lea.vmem %s0, 8
    %v48 = vld [vmem:[%s47] sm:$0x1]
    %49 = vrot.lane.b32.xlu0 %v48, 64
    %v50 = vpop.permute.xlu0 %49
    %vm51 = vcmask 589312
    %52 = vst.msk [vmem:[#allocation0] sm:$0x1] %vm51, %v50
    %s53 = scalar_lea.vmem %s0, 7
    %v54 = vld [vmem:[%s53] sm:$0x1]
    %55 = vrot.lane.b32.xlu0 %v54, 56
    %v56 = vpop.permute.xlu0 %55
    %vm57 = vcmask 523712
    %58 = vst.msk [vmem:[#allocation0] sm:$0x1] %vm57, %v56
    %s59 = scalar_lea.vmem %s0, 6
    %v60 = vld [vmem:[%s59] sm:$0x1]
    %61 = vrot.lane.b32.xlu0 %v60, 48
    %v62 = vpop.permute.xlu0 %61
    %vm63 = vcmask 458112
    %64 = vst.msk [vmem:[#allocation0] sm:$0x1] %vm63, %v62
    %s65 = scalar_lea.vmem %s0, 5
    %v66 = vld [vmem:[%s65] sm:$0x1]
    %67 = vrot.lane.b32.xlu0 %v66, 40
    %v68 = vpop.permute.xlu0 %67
    %vm69 = vcmask 392512
    %70 = vst.msk [vmem:[#allocation0] sm:$0x1] %vm69, %v68
    %s71 = scalar_lea.vmem %s0, 4
    %v72 = vld [vmem:[%s71] sm:$0x1]
    %73 = vrot.lane.b32.xlu0 %v72, 32
    %v74 = vpop.permute.xlu0 %73
    %vm75 = vcmask 326912
    %76 = vst.msk [vmem:[#allocation0] sm:$0x1] %vm75, %v74
    %s77 = scalar_lea.vmem %s0, 3
    %v78 = vld [vmem:[%s77] sm:$0x1]
    %79 = vrot.lane.b32.xlu0 %v78, 24
    %v80 = vpop.permute.xlu0 %79
    %vm81 = vcmask 261312
    %82 = vst.msk [vmem:[#allocation0] sm:$0x1] %vm81, %v80
    %s83 = scalar_lea.vmem %s0, 2
    %v84 = vld [vmem:[%s83] sm:$0x1]
    %85 = vrot.lane.b32.xlu0 %v84, 16
    %v86 = vpop.permute.xlu0 %85
    %vm87 = vcmask 195712
    %88 = vst.msk [vmem:[#allocation0] sm:$0x1] %vm87, %v86
    %s89 = scalar_lea.vmem %s0, 1
    %v90 = vld [vmem:[%s89] sm:$0x1]
    %91 = vrot.lane.b32.xlu0 %v90, 8
    %v92 = vpop.permute.xlu0 %91
    %vm93 = vcmask 130112
    %94 = vst.msk [vmem:[#allocation0] sm:$0x1] %vm93, %v92
    %s96 = sshllo.u32 0, 1
    %v98 = vld [vmem:[#allocation0] sm:%s96]
    %s99 = sshllo.u32 0, 1
    %100 = vst [vmem:[%s1] sm:%s99] %v98

// kernel: trace_amp_wrape_forward.1
$region0: #{trace_amp_wrape_forward.1}
  #allocation0 [shape = 'u32[]', space=smem, size = 0x4, offset = 0x4, fixed_abs, tag = 'smem constant byte address 0x4 - core index']
  #allocation1 [shape = 'u32[144,128]{1,0:T(1,128)}', space=vmem, size = 0x12000, scoped, tag = 'internal scratch']
  %s0 = inlined_call_operand.vmem [shape: bf16[32,576], index: 0, kind: input, shape index: {}]
  %s1 = inlined_call_operand.vmem [shape: bf16[576,128], index: 1, kind: input, shape index: {}]
  %s2 = inlined_call_operand.vmem [shape: f32[1,128], index: 2, kind: input, shape index: {}]
  %s3 = inlined_call_operand.vmem [shape: bf16[32,128], index: 3, kind: output, shape index: {}]
  %s4 = sld [smem:[#allocation0]]
  $region45: #{trace_amp_wrape_forward.1} parent=0
    _
  %s6 = ssub.s32 1, %s4
  %s7 = scalar_select 0, %s6, %s4
  loop: start=0, step=1, limit=6
  $region2: #{trace_amp_wrape_forward.1} parent=0 // loop_pre_header
    _
  $region3: #{trace_amp_wrape_forward.1} parent=0 // loop_header
    %s9 = sphi 0, %s13
    %p10 = scmp.ge.s32.totalorder %s9, 6
    %s19 = sphi 0, %s21
    %s22 = sphi 0, %s19
    %s23 = sphi 0, %s22
    %s39 = sphi 0, %s23
    %s43 = sphi 0, %s43
    %s45 = sphi 0, %s43
    %s46 = sphi 0, %s45
    %s60 = sphi 0, %s46
    %s64 = sphi 0, %s64
    %s66 = sphi 0, %s64
    %s67 = sphi 0, %s66
    %s81 = sphi 0, %s67
    %s87 = sphi 0, %s89
    %s90 = sphi 0, %s87
    %s91 = sphi 0, %s90
    %s107 = sphi 0, %s91
  $region4: #{trace_amp_wrape_forward.1} parent=0 // loop_header_branch
    %12 = sbr.rel (%p10) target = $region8
  $region5: #{trace_amp_wrape_forward.1} parent=0 // loop_body
    %s14 = ssub.s32 %s9, 1
    %s15 = ssub.s32 %s9, 2
    %s16 = sadd.s32 %s9, 1
    %s17 = ssub.s32 %s9, %s16
    %p18 = scmp.eq.s32.totalorder %s17, 0
    %s20 = sadd.s32 %s19, 1
    %s21 = scalar_select %p18, %s19, %s20
    %p24 = pneg %p18
    %p25 = scmp.eq.s32.totalorder %s9, 3
    %p26 = por %p24, %p25
    %p27 = scmp.ne.s32.totalorder %s19, %s22
    %p28 = scmp.eq.s32.totalorder %s9, 0
    %p29 = por %p27, %p28
    %p30 = scmp.ne.s32.totalorder %s19, %s22
    %p31 = scmp.eq.s32.totalorder %s14, 3
    %p32 = por %p30, %p31
    %p33 = scmp.ne.s32.totalorder %s22, %s23
    %p34 = scmp.eq.s32.totalorder %s14, 0
    %p35 = por %p33, %p34
    %p36 = scmp.ne.s32.totalorder %s22, %s23
    %p37 = scmp.eq.s32.totalorder %s15, 3
    %p38 = por %p36, %p37
    %p40 = scmp.ne.s32.totalorder %s23, %s39
    %p41 = scmp.eq.s32.totalorder %s15, 0
    %p42 = por %p40, %p41
    %s44 = sadd.s32 %s43, 1
    %p47 = scmp.eq.s32.totalorder %s9, 3
    %p48 = scmp.ne.s32.totalorder %s43, %s45
    %p49 = scmp.eq.s32.totalorder %s9, 0
    %p50 = por %p48, %p49
    %p51 = scmp.ne.s32.totalorder %s43, %s45
    %p52 = scmp.eq.s32.totalorder %s14, 3
    %p53 = por %p51, %p52
    %p54 = scmp.ne.s32.totalorder %s45, %s46
    %p55 = scmp.eq.s32.totalorder %s14, 0
    %p56 = por %p54, %p55
    %p57 = scmp.ne.s32.totalorder %s45, %s46
    %p58 = scmp.eq.s32.totalorder %s15, 3
    %p59 = por %p57, %p58
    %p61 = scmp.ne.s32.totalorder %s46, %s60
    %p62 = scmp.eq.s32.totalorder %s15, 0
    %p63 = por %p61, %p62
    %s65 = sadd.s32 %s64, 1
    %p68 = scmp.eq.s32.totalorder %s9, 3
    %p69 = scmp.ne.s32.totalorder %s64, %s66
    %p70 = scmp.eq.s32.totalorder %s9, 0
    %p71 = por %p69, %p70
    %p72 = scmp.ne.s32.totalorder %s64, %s66
    %p73 = scmp.eq.s32.totalorder %s14, 3
    %p74 = por %p72, %p73
    %p75 = scmp.ne.s32.totalorder %s66, %s67
    %p76 = scmp.eq.s32.totalorder %s14, 0
    %p77 = por %p75, %p76
    %p78 = scmp.ne.s32.totalorder %s66, %s67
    %p79 = scmp.eq.s32.totalorder %s15, 3
    %p80 = por %p78, %p79
    %p82 = scmp.ne.s32.totalorder %s67, %s81
    %p83 = scmp.eq.s32.totalorder %s15, 0
    %p84 = por %p82, %p83
    %s85 = ssub.s32 %s9, %s16
    %p86 = scmp.eq.s32.totalorder %s85, 0
    %s88 = sadd.s32 %s87, 1
    %s89 = scalar_select %p86, %s87, %s88
    %p92 = pneg %p86
    %p93 = scmp.eq.s32.totalorder %s9, 3
    %p94 = por %p92, %p93
    %p95 = scmp.ne.s32.totalorder %s87, %s90
    %p96 = scmp.eq.s32.totalorder %s9, 0
    %p97 = por %p95, %p96
    %p98 = scmp.ne.s32.totalorder %s87, %s90
    %p99 = scmp.eq.s32.totalorder %s14, 3
    %p100 = por %p98, %p99
    %p101 = scmp.ne.s32.totalorder %s90, %s91
    %p102 = scmp.eq.s32.totalorder %s14, 0
    %p103 = por %p101, %p102
    %p104 = scmp.ne.s32.totalorder %s90, %s91
    %p105 = scmp.eq.s32.totalorder %s15, 3
    %p106 = por %p104, %p105
    %p108 = scmp.ne.s32.totalorder %s91, %s107
    %p109 = scmp.eq.s32.totalorder %s15, 0
    %p110 = por %p108, %p109
    %p111 = scmp.le.s32.totalorder 1, %s9
    %p112 = scmp.lt.s32.totalorder %s9, 5
    %p113 = pnand %p111, %p112
    %p114 = pneg %p113
    // Predicated region
    $region9: #{trace_amp_wrape_forward.1} parent=5 // pred_check
      _
    $region10: #{trace_amp_wrape_forward.1} parent=5 // pred_check_branch
      %116 = sbr.rel (%p113) target = $region12
    $region11: #{trace_amp_wrape_forward.1} parent=5 // pred_region
      %s117 = ssub.s32 %s9, 1
      // Predicated region
      $region13: #{trace_amp_wrape_forward.1} parent=11 // pred_check
        %p118 = pneg %p56
      $region14: #{trace_amp_wrape_forward.1} parent=11 // pred_check_branch
        %120 = sbr.rel (%p118) target = $region16
      $region15: #{trace_amp_wrape_forward.1} parent=11 // pred_region
        _
      $region16: #{trace_amp_wrape_forward.1} parent=11 // pred_fallthru
        _
      // Predicated region
      $region17: #{trace_amp_wrape_forward.1} parent=11 // pred_check
        %p121 = pneg %p77
      $region18: #{trace_amp_wrape_forward.1} parent=11 // pred_check_branch
        %123 = sbr.rel (%p121) target = $region20
      $region19: #{trace_amp_wrape_forward.1} parent=11 // pred_region
        _
      $region20: #{trace_amp_wrape_forward.1} parent=11 // pred_fallthru
        _
    $region12: #{trace_amp_wrape_forward.1} parent=5 // pred_fallthru
      _
    %p124 = scmp.lt.s32.totalorder %s9, 4
    // Predicated region
    $region21: #{trace_amp_wrape_forward.1} parent=5 // pred_check
      %p125 = pneg %p124
    $region22: #{trace_amp_wrape_forward.1} parent=5 // pred_check_branch
      %127 = sbr.rel (%p125) target = $region24
    $region23: #{trace_amp_wrape_forward.1} parent=5 // pred_region
      // Predicated region
      $region25: #{trace_amp_wrape_forward.1} parent=23 // pred_check
        %p128 = pneg %p29
      $region26: #{trace_amp_wrape_forward.1} parent=23 // pred_check_branch
        %130 = sbr.rel (%p128) target = $region28
      $region27: #{trace_amp_wrape_forward.1} parent=23 // pred_region
        %p131 = scmp.lt.s32.totalorder %s9, 3
        %s132 = scalar_select %p131, %s9, 3
        %s133 = smul.addr %s132, 5
        %s134 = smul.addr %s133, 4
        %s135 = scalar_lea.vmem %s0, %s134
      $region28: #{trace_amp_wrape_forward.1} parent=23 // pred_fallthru
        _
    $region24: #{trace_amp_wrape_forward.1} parent=5 // pred_fallthru
      _
    %p136 = scmp.le.s32.totalorder 1, %s9
    %p137 = scmp.lt.s32.totalorder %s9, 5
    %p138 = pnand %p136, %p137
    %p139 = pneg %p138
    // Predicated region
    $region29: #{trace_amp_wrape_forward.1} parent=5 // pred_check
      _
    $region30: #{trace_amp_wrape_forward.1} parent=5 // pred_check_branch
      %141 = sbr.rel (%p138) target = $region32
    $region31: #{trace_amp_wrape_forward.1} parent=5 // pred_region
      %s142 = ssub.s32 %s9, 1
      %p143 = scmp.lt.s32.totalorder %s14, 3
      %s144 = scalar_select %p143, %s14, 3
      %s145 = smul.addr %s144, 5
      %s146 = smul.addr %s145, 4
      %s147 = scalar_lea.vmem %s0, %s146
      %p148 = pneg %p35
      %p149 = pneg %p32
      %p150 = pneg %p56
      %p151 = pneg %p53
      %p152 = pneg %p77
      %p153 = pneg %p74
      %p154 = pneg %p103
      %p155 = pneg %p100
      %p156 = scmp.lt.s32.totalorder %s14, 3
      %s157 = scalar_select %p156, %s14, 3
      %s158 = smul.addr %s157, 4
      %s159 = scalar_lea.vmem %s3, %s158
      %p160 = scmp.lt.s32.totalorder %s14, 3
      %s161 = scalar_select %p160, %s14, 3
      %s162 = smul.addr %s161, 5
      %s163 = smul.addr %s162, 4
      %s164 = scalar_lea.vmem %s0, %s163
      %p165 = scmp.lt.s32.totalorder %s14, 3
      %s166 = scalar_select %p165, %s14, 3
      %s167 = smul.addr %s166, 4
      %s168 = scalar_lea.vmem %s3, %s167
      %v170 = vld [vmem:[%s164] sm:$0xff]
      %v171 = vld [vmem:[%s164 + $0x8] sm:$0xff]
      %v172 = vld [vmem:[%s164 + $0x10] sm:$0xf]
      %v173 = vld [vmem:[%s1] sm:$0xf]
      %v174 = vld [vmem:[%s1 + $0x4] sm:$0xf]
      %v175 = vld [vmem:[%s1 + $0x8] sm:$0xf]
      %v176 = vld [vmem:[%s1 + $0xc] sm:$0xf]
      %v177 = vld [vmem:[%s1 + $0x10] sm:$0xf]
      %v178 = vld [vmem:[%s1 + $0x14] sm:$0xf]
      %v179 = vld [vmem:[%s1 + $0x18] sm:$0xf]
      %v180 = vld [vmem:[%s1 + $0x1c] sm:$0xf]
      %v181 = vld [vmem:[%s1 + $0x20] sm:$0xf]
      %v182 = vld [vmem:[%s1 + $0x24] sm:$0xf]
      %v183 = vld [vmem:[%s1 + $0x28] sm:$0xf]
      %v184 = vld [vmem:[%s1 + $0x2c] sm:$0xf]
      %v185 = vld [vmem:[%s1 + $0x30] sm:$0xf]
      %v186 = vld [vmem:[%s1 + $0x34] sm:$0xf]
      %v187 = vld [vmem:[%s1 + $0x38] sm:$0xf]
      %v188 = vld [vmem:[%s1 + $0x3c] sm:$0xf]
      %v189 = vld [vmem:[%s1 + $0x40] sm:$0xf]
      %v190 = vld [vmem:[%s1 + $0x44] sm:$0xf]
      %v191 = vld [vmem:[%s1 + $0x48] sm:$0xf]
      %v192 = vld [vmem:[%s1 + $0x4c] sm:$0xf]
      %v193 = vld [vmem:[%s1 + $0x50] sm:$0xf]
      %v194 = vld [vmem:[%s1 + $0x54] sm:$0xf]
      %v195 = vld [vmem:[%s1 + $0x58] sm:$0xf]
      %v196 = vld [vmem:[%s1 + $0x5c] sm:$0xf]
      %v197 = vld [vmem:[%s1 + $0x60] sm:$0xf]
      %v198 = vld [vmem:[%s1 + $0x64] sm:$0xf]
      %v199 = vld [vmem:[%s1 + $0x68] sm:$0xf]
      %v200 = vld [vmem:[%s1 + $0x6c] sm:$0xf]
      %v201 = vld [vmem:[%s1 + $0x70] sm:$0xf]
      %v202 = vld [vmem:[%s1 + $0x74] sm:$0xf]
      %v203 = vld [vmem:[%s1 + $0x78] sm:$0xf]
      %v204 = vld [vmem:[%s1 + $0x7c] sm:$0xf]
      %v205 = vld [vmem:[%s1 + $0x80] sm:$0xf]
      %v206 = vld [vmem:[%s1 + $0x84] sm:$0xf]
      %v207 = vld [vmem:[%s1 + $0x88] sm:$0xf]
      %v208 = vld [vmem:[%s1 + $0x8c] sm:$0xf]
      %v209 = vld [vmem:[%s1 + $0x90] sm:$0xf]
      %v210 = vld [vmem:[%s1 + $0x94] sm:$0xf]
      %v211 = vld [vmem:[%s1 + $0x98] sm:$0xf]
      %v212 = vld [vmem:[%s1 + $0x9c] sm:$0xf]
      %v213 = vld [vmem:[%s1 + $0xa0] sm:$0xf]
      %v214 = vld [vmem:[%s1 + $0xa4] sm:$0xf]
      %v215 = vld [vmem:[%s1 + $0xa8] sm:$0xf]
      %v216 = vld [vmem:[%s1 + $0xac] sm:$0xf]
      %v217 = vld [vmem:[%s1 + $0xb0] sm:$0xf]
      %v218 = vld [vmem:[%s1 + $0xb4] sm:$0xf]
      %v219 = vld [vmem:[%s1 + $0xb8] sm:$0xf]
      %v220 = vld [vmem:[%s1 + $0xbc] sm:$0xf]
      %v221 = vld [vmem:[%s1 + $0xc0] sm:$0xf]
      %v222 = vld [vmem:[%s1 + $0xc4] sm:$0xf]
      %v223 = vld [vmem:[%s1 + $0xc8] sm:$0xf]
      %v224 = vld [vmem:[%s1 + $0xcc] sm:$0xf]
      %v225 = vld [vmem:[%s1 + $0xd0] sm:$0xf]
      %v226 = vld [vmem:[%s1 + $0xd4] sm:$0xf]
      %v227 = vld [vmem:[%s1 + $0xd8] sm:$0xf]
      %v228 = vld [vmem:[%s1 + $0xdc] sm:$0xf]
      %v229 = vld [vmem:[%s1 + $0xe0] sm:$0xf]
      %v230 = vld [vmem:[%s1 + $0xe4] sm:$0xf]
      %v231 = vld [vmem:[%s1 + $0xe8] sm:$0xf]
      %v232 = vld [vmem:[%s1 + $0xec] sm:$0xf]
      %v233 = vld [vmem:[%s1 + $0xf0] sm:$0xf]
      %v234 = vld [vmem:[%s1 + $0xf4] sm:$0xf]
      %v235 = vld [vmem:[%s1 + $0xf8] sm:$0xf]
      %v236 = vld [vmem:[%s1 + $0xfc] sm:$0xf]
      %v237 = vld [vmem:[%s1 + $0x100] sm:$0xf]
      %v238 = vld [vmem:[%s1 + $0x104] sm:$0xf]
      %v239 = vld [vmem:[%s1 + $0x108] sm:$0xf]
      %v240 = vld [vmem:[%s1 + $0x10c] sm:$0xf]
      %v241 = vld [vmem:[%s1 + $0x110] sm:$0xf]
      %v242 = vld [vmem:[%s1 + $0x114] sm:$0xf]
      %v243 = vld [vmem:[%s1 + $0x118] sm:$0xf]
      %v244 = vld [vmem:[%s1 + $0x11c] sm:$0xf]
      %v245 = vld [vmem:[%s2] sm:$0x1]
      %v247 = vlaneseq
      %v248 = vshrl.u32 %v247, 7
      %v249 = vsub.s32 0, %v248
      %v250 = vrot.slane %v245, %v249
      %v255 = vunpack.c.l.b16 %v170
      %v256 = vunpack.c.h.b16 %v170
      %v257 = vunpack.c.l.b16 %v171
      %v258 = vunpack.c.h.b16 %v171
      %v259 = vunpack.c.l.b16 %v172
      %v260 = vpack.c.b16 %v255, %v255
      %v261 = vpack.c.b16 %v256, %v256
      %v262 = vpack.c.b16 %v257, %v257
      %v263 = vpack.c.b16 %v258, %v258
      %v264 = vpack.c.b16 %v259, %v259
      %v341 = vunpack.c.l.b16 %v173
      %v342 = vunpack.c.l.b16 %v174
      %v343 = vunpack.c.l.b16 %v175
      %v344 = vunpack.c.l.b16 %v176
      %v345 = vunpack.c.l.b16 %v177
      %v346 = vunpack.c.l.b16 %v178
      %v347 = vunpack.c.l.b16 %v179
      %v348 = vunpack.c.l.b16 %v180
      %v349 = vunpack.c.l.b16 %v181
      %v350 = vunpack.c.l.b16 %v182
      %v351 = vunpack.c.l.b16 %v183
      %v352 = vunpack.c.l.b16 %v184
      %v353 = vunpack.c.l.b16 %v185
      %v354 = vunpack.c.l.b16 %v186
      %v355 = vunpack.c.l.b16 %v187
      %v356 = vunpack.c.l.b16 %v188
      %v357 = vunpack.c.l.b16 %v189
      %v358 = vunpack.c.l.b16 %v190
      %v359 = vunpack.c.l.b16 %v191
      %v360 = vunpack.c.l.b16 %v192
      %v361 = vunpack.c.l.b16 %v193
      %v362 = vunpack.c.l.b16 %v194
      %v363 = vunpack.c.l.b16 %v195
      %v364 = vunpack.c.l.b16 %v196
      %v365 = vunpack.c.l.b16 %v197
      %v366 = vunpack.c.l.b16 %v198
      %v367 = vunpack.c.l.b16 %v199
      %v368 = vunpack.c.l.b16 %v200
      %v369 = vunpack.c.l.b16 %v201
      %v370 = vunpack.c.l.b16 %v202
      %v371 = vunpack.c.l.b16 %v203
      %v372 = vunpack.c.l.b16 %v204
      %v373 = vunpack.c.l.b16 %v205
      %v374 = vunpack.c.l.b16 %v206
      %v375 = vunpack.c.l.b16 %v207
      %v376 = vunpack.c.l.b16 %v208
      %v377 = vunpack.c.l.b16 %v209
      %v378 = vunpack.c.l.b16 %v210
      %v379 = vunpack.c.l.b16 %v211
      %v380 = vunpack.c.l.b16 %v212
      %v381 = vunpack.c.l.b16 %v213
      %v382 = vunpack.c.l.b16 %v214
      %v383 = vunpack.c.l.b16 %v215
      %v384 = vunpack.c.l.b16 %v216
      %v385 = vunpack.c.l.b16 %v217
      %v386 = vunpack.c.l.b16 %v218
      %v387 = vunpack.c.l.b16 %v219
      %v388 = vunpack.c.l.b16 %v220
      %v389 = vunpack.c.l.b16 %v221
      %v390 = vunpack.c.l.b16 %v222
      %v391 = vunpack.c.l.b16 %v223
      %v392 = vunpack.c.l.b16 %v224
      %v393 = vunpack.c.l.b16 %v225
      %v394 = vunpack.c.l.b16 %v226
      %v395 = vunpack.c.l.b16 %v227
      %v396 = vunpack.c.l.b16 %v228
      %v397 = vunpack.c.l.b16 %v229
      %v398 = vunpack.c.l.b16 %v230
      %v399 = vunpack.c.l.b16 %v231
      %v400 = vunpack.c.l.b16 %v232
      %v401 = vunpack.c.l.b16 %v233
      %v402 = vunpack.c.l.b16 %v234
      %v403 = vunpack.c.l.b16 %v235
      %v404 = vunpack.c.l.b16 %v236
      %v405 = vunpack.c.l.b16 %v237
      %v406 = vunpack.c.l.b16 %v238
      %v407 = vunpack.c.l.b16 %v239
      %v408 = vunpack.c.l.b16 %v240
      %v409 = vunpack.c.l.b16 %v241
      %v410 = vunpack.c.l.b16 %v242
      %v411 = vunpack.c.l.b16 %v243
      %v412 = vunpack.c.l.b16 %v244
      %v413 = vpack.c.b16 %v342, %v341
      %v414 = vpack.c.b16 %v344, %v343
      %v415 = vpack.c.b16 %v346, %v345
      %v416 = vpack.c.b16 %v348, %v347
      %v417 = vpack.c.b16 %v350, %v349
      %v418 = vpack.c.b16 %v352, %v351
      %v419 = vpack.c.b16 %v354, %v353
      %v420 = vpack.c.b16 %v356, %v355
      %v421 = vpack.c.b16 %v358, %v357
      %v422 = vpack.c.b16 %v360, %v359
      %v423 = vpack.c.b16 %v362, %v361
      %v424 = vpack.c.b16 %v364, %v363
      %v425 = vpack.c.b16 %v366, %v365
      %v426 = vpack.c.b16 %v368, %v367
      %v427 = vpack.c.b16 %v370, %v369
      %v428 = vpack.c.b16 %v372, %v371
      %v429 = vpack.c.b16 %v374, %v373
      %v430 = vpack.c.b16 %v376, %v375
      %v431 = vpack.c.b16 %v378, %v377
      %v432 = vpack.c.b16 %v380, %v379
      %v433 = vpack.c.b16 %v382, %v381
      %v434 = vpack.c.b16 %v384, %v383
      %v435 = vpack.c.b16 %v386, %v385
      %v436 = vpack.c.b16 %v388, %v387
      %v437 = vpack.c.b16 %v390, %v389
      %v438 = vpack.c.b16 %v392, %v391
      %v439 = vpack.c.b16 %v394, %v393
      %v440 = vpack.c.b16 %v396, %v395
      %v441 = vpack.c.b16 %v398, %v397
      %v442 = vpack.c.b16 %v400, %v399
      %v443 = vpack.c.b16 %v402, %v401
      %v444 = vpack.c.b16 %v404, %v403
      %v445 = vpack.c.b16 %v406, %v405
      %v446 = vpack.c.b16 %v408, %v407
      %v447 = vpack.c.b16 %v410, %v409
      %v448 = vpack.c.b16 %v412, %v411
      %vm485 = vcmask 523264
      %v487 = vsel %vm485, %v264, 0
      %489 = vmatprep.subr.bf16.mxu0 0
      %490 = vmatpush1.bf16.msra.mxu0 %v413
      %491 = vmatprep.subr.bf16.mxu0 0
      %492 = vmatpush1.bf16.msra.mxu0 %v414
      %493 = vmatprep.subr.bf16.mxu0 0
      %494 = vmatpush1.bf16.msra.mxu0 %v415
      %495 = vmatprep.subr.bf16.mxu0 0
      %496 = vmatpush1.bf16.msra.mxu0 %v416
      %497 = vmatprep.subr.bf16.mxu0 0
      %498 = vmatpush1.bf16.msra.mxu0 %v417
      %499 = vmatprep.subr.bf16.mxu0 0
      %500 = vmatpush1.bf16.msra.mxu0 %v418
      %501 = vmatprep.subr.bf16.mxu0 0
      %502 = vmatpush1.bf16.msra.mxu0 %v419
      %503 = vmatprep.subr.bf16.mxu0 0
      %504 = vmatpush1.bf16.msra.mxu0 %v420
      %505 = vmatprep.subr.bf16.mxu0 0
      %506 = vmatpush1.bf16.msra.mxu0 %v421
      %507 = vmatprep.subr.bf16.mxu0 0
      %508 = vmatpush1.bf16.msra.mxu0 %v422
      %509 = vmatprep.subr.bf16.mxu0 0
      %510 = vmatpush1.bf16.msra.mxu0 %v423
      %511 = vmatprep.subr.bf16.mxu0 0
      %512 = vmatpush1.bf16.msra.mxu0 %v424
      %513 = vmatprep.subr.bf16.mxu0 0
      %514 = vmatpush1.bf16.msra.mxu0 %v425
      %515 = vmatprep.subr.bf16.mxu0 0
      %516 = vmatpush1.bf16.msra.mxu0 %v426
      %517 = vmatprep.subr.bf16.mxu0 0
      %518 = vmatpush1.bf16.msra.mxu0 %v427
      %519 = vmatprep.subr.bf16.mxu0 0
      %520 = vmatpush1.bf16.msra.mxu0 %v428
      %521 = vmatprep.mubr.bf16.mxu0 %v261
      %522 = vmatmul.mubr.bf16.gmra.mrb[0].mxu0 %v260
      %v523 = vpop.f32.mrb[0].mxu0
      %v524 = vadd.f32 %v250, %v523
      %v525 = vpop.f32.mrb[0].mxu0
      %v526 = vpop.f32.mrb[0].mxu0
      %v527 = vpop.f32.mrb[0].mxu0
      %528 = vdwg.mxu0
      %529 = vmatprep.subr.bf16.mxu0 0
      %530 = vmatpush1.bf16.msra.mxu0 %v429
      %531 = vmatprep.subr.bf16.mxu0 0
      %532 = vmatpush1.bf16.msra.mxu0 %v430
      %533 = vmatprep.subr.bf16.mxu0 0
      %534 = vmatpush1.bf16.msra.mxu0 %v431
      %535 = vmatprep.subr.bf16.mxu0 0
      %536 = vmatpush1.bf16.msra.mxu0 %v432
      %537 = vmatprep.subr.bf16.mxu0 0
      %538 = vmatpush1.bf16.msra.mxu0 %v433
      %539 = vmatprep.subr.bf16.mxu0 0
      %540 = vmatpush1.bf16.msra.mxu0 %v434
      %541 = vmatprep.subr.bf16.mxu0 0
      %542 = vmatpush1.bf16.msra.mxu0 %v435
      %543 = vmatprep.subr.bf16.mxu0 0
      %544 = vmatpush1.bf16.msra.mxu0 %v436
      %545 = vmatprep.subr.bf16.mxu0 0
      %546 = vmatpush1.bf16.msra.mxu0 %v437
      %547 = vmatprep.subr.bf16.mxu0 0
      %548 = vmatpush1.bf16.msra.mxu0 %v438
      %549 = vmatprep.subr.bf16.mxu0 0
      %550 = vmatpush1.bf16.msra.mxu0 %v439
      %551 = vmatprep.subr.bf16.mxu0 0
      %552 = vmatpush1.bf16.msra.mxu0 %v440
      %553 = vmatprep.subr.bf16.mxu0 0
      %554 = vmatpush1.bf16.msra.mxu0 %v441
      %555 = vmatprep.subr.bf16.mxu0 0
      %556 = vmatpush1.bf16.msra.mxu0 %v442
      %557 = vmatprep.subr.bf16.mxu0 0
      %558 = vmatpush1.bf16.msra.mxu0 %v443
      %559 = vmatprep.subr.bf16.mxu0 0
      %560 = vmatpush1.bf16.msra.mxu0 %v444
      %561 = vmatprep.mubr.bf16.mxu0 %v263
      %562 = vmatmul.mubr.bf16.gmra.mrb[0].mxu0 %v262
      %v563 = vpop.f32.mrb[0].mxu0
      %v564 = vadd.f32 %v524, %v563
      %v565 = vpop.f32.mrb[0].mxu0
      %v566 = vpop.f32.mrb[0].mxu0
      %v567 = vpop.f32.mrb[0].mxu0
      %568 = vdwg.mxu0
      %569 = vmatprep.subr.bf16.mxu0 0
      %570 = vmatpush1.bf16.msra.mxu0 %v445
      %571 = vmatprep.subr.bf16.mxu0 0
      %572 = vmatpush1.bf16.msra.mxu0 %v446
      %573 = vmatprep.subr.bf16.mxu0 0
      %574 = vmatpush1.bf16.msra.mxu0 %v447
      %575 = vmatprep.subr.bf16.mxu0 0
      %576 = vmatpush1.bf16.msra.mxu0 %v448
      %577 = vmatprep.subr.bf16.mxu0 0
      %578 = vmatpush1.bf16.msra.mxu0 0
      %579 = vmatprep.subr.bf16.mxu0 0
      %580 = vmatpush1.bf16.msra.mxu0 0
      %581 = vmatprep.subr.bf16.mxu0 0
      %582 = vmatpush1.bf16.msra.mxu0 0
      %583 = vmatprep.subr.bf16.mxu0 0
      %584 = vmatpush1.bf16.msra.mxu0 0
      %585 = vmatprep.subr.bf16.mxu0 0
      %586 = vmatpush1.bf16.msra.mxu0 0
      %587 = vmatprep.subr.bf16.mxu0 0
      %588 = vmatpush1.bf16.msra.mxu0 0
      %589 = vmatprep.subr.bf16.mxu0 0
      %590 = vmatpush1.bf16.msra.mxu0 0
      %591 = vmatprep.subr.bf16.mxu0 0
      %592 = vmatpush1.bf16.msra.mxu0 0
      %593 = vmatprep.subr.bf16.mxu0 0
      %594 = vmatpush1.bf16.msra.mxu0 0
      %595 = vmatprep.subr.bf16.mxu0 0
      %596 = vmatpush1.bf16.msra.mxu0 0
      %597 = vmatprep.subr.bf16.mxu0 0
      %598 = vmatpush1.bf16.msra.mxu0 0
      %599 = vmatprep.subr.bf16.mxu0 0
      %600 = vmatpush1.bf16.msra.mxu0 0
      %601 = vmatprep.mubr.bf16.mxu0 0
      %602 = vmatmul.mubr.bf16.gmra.mrb[0].mxu0 %v487
      %v603 = vpop.f32.mrb[0].mxu0
      %v604 = vadd.f32 %v564, %v603
      %v605 = vpop.f32.mrb[0].mxu0
      %v606 = vpop.f32.mrb[0].mxu0
      %v607 = vpop.f32.mrb[0].mxu0
      %608 = vdwg.mxu0
      %v609 = vmax.f32 %v604, 0.0
      %v610 = vpack.c.bf16 %v609, %v609
      %611 = vst [vmem:[%s168] sm:$0xf] %v610
      %p612 = scmp.lt.s32.totalorder %s14, 3
      %s613 = scalar_select %p612, %s14, 3
      %s614 = smul.addr %s613, 4
      %s615 = scalar_lea.vmem %s3, %s614
      // Predicated region
      $region33: #{trace_amp_wrape_forward.1} parent=31 // pred_check
        %p616 = pneg %p100
      $region34: #{trace_amp_wrape_forward.1} parent=31 // pred_check_branch
        %618 = sbr.rel (%p616) target = $region36
      $region35: #{trace_amp_wrape_forward.1} parent=31 // pred_region
        _
      $region36: #{trace_amp_wrape_forward.1} parent=31 // pred_fallthru
        _
    $region32: #{trace_amp_wrape_forward.1} parent=5 // pred_fallthru
      _
    %p619 = scmp.le.s32.totalorder 2, %s9
    // Predicated region
    $region37: #{trace_amp_wrape_forward.1} parent=5 // pred_check
      %p620 = pneg %p619
    $region38: #{trace_amp_wrape_forward.1} parent=5 // pred_check_branch
      %622 = sbr.rel (%p620) target = $region40
    $region39: #{trace_amp_wrape_forward.1} parent=5 // pred_region
      %s623 = ssub.s32 %s9, 2
      // Predicated region
      $region41: #{trace_amp_wrape_forward.1} parent=39 // pred_check
        %p624 = pneg %p106
      $region42: #{trace_amp_wrape_forward.1} parent=39 // pred_check_branch
        %626 = sbr.rel (%p624) target = $region44
      $region43: #{trace_amp_wrape_forward.1} parent=39 // pred_region
        %p627 = scmp.lt.s32.totalorder %s15, 3
        %s628 = scalar_select %p627, %s15, 3
        %s629 = smul.addr %s628, 4
        %s630 = scalar_lea.vmem %s3, %s629
      $region44: #{trace_amp_wrape_forward.1} parent=39 // pred_fallthru
        _
    $region40: #{trace_amp_wrape_forward.1} parent=5 // pred_fallthru
      _
  $region6: #{trace_amp_wrape_forward.1} parent=0 // loop_footer
    %s13 = sadd.s32 1, %s9
  $region7: #{trace_amp_wrape_forward.1} parent=0 // loop_footer_branch
    %8 = sbr.rel target = $region3
  $region8: #{trace_amp_wrape_forward.1} parent=0 // loop_exit
    _

</llo_original>
